<compile_context>
chip_gen: v7x
topology: tpu7x:2x2x1
jax: 0.10.0
libtpu: 0.0.40
codegen_flags: <defaults>
</compile_context>

<pallas_src>
import functools

import jax
import jax.numpy as jnp
from jax.experimental import pallas as pl
from jax.experimental.pallas import tpu as pltpu


def _round_up(x, m):
    return (x + m - 1) // m * m


# ---------------------------------------------------------------------------
# Kernels
# ---------------------------------------------------------------------------

def _ffn_kernel_resident(x_ref, w1_ref, b1_ref, w2_ref, b2_ref, o_ref):
    # Weights are VMEM-resident for the whole grid (constant index_map =>
    # DMA'd exactly once); full d_ff reduction done in one shot per row tile.
    h = jnp.dot(x_ref[...], w1_ref[...], preferred_element_type=jnp.float32)
    h = jnp.maximum(h + b1_ref[...], 0.0)
    # dropout == identity in eval mode
    y = jnp.dot(h.astype(w2_ref.dtype), w2_ref[...],
                preferred_element_type=jnp.float32)
    o_ref[...] = (y + b2_ref[...]).astype(o_ref.dtype)


def _ffn_kernel_chunked(x_ref, w1_ref, b1_ref, w2_ref, b2_ref, o_ref, acc_ref):
    # 2-D grid: (row tiles, d_ff chunks).  f32 accumulator resident across j.
    j = pl.program_id(1)

    @pl.when(j == 0)
    def _():
        acc_ref[...] = jnp.zeros_like(acc_ref)

    h = jnp.dot(x_ref[...], w1_ref[...], preferred_element_type=jnp.float32)
    h = jnp.maximum(h + b1_ref[...], 0.0)
    # dropout == identity in eval mode
    acc_ref[...] += jnp.dot(h.astype(w2_ref.dtype), w2_ref[...],
                            preferred_element_type=jnp.float32)

    @pl.when(j == pl.num_programs(1) - 1)
    def _():
        o_ref[...] = (acc_ref[...] + b2_ref[...]).astype(o_ref.dtype)


# ---------------------------------------------------------------------------
# Planning / VMEM budgeting
# ---------------------------------------------------------------------------

def _vmem_budget_bytes():
    """Generation-aware VMEM budget (physical capacity minus headroom)."""
    try:
        cap = int(pltpu.get_tpu_info().vmem_capacity_bytes)
        if cap <= 0:
            raise ValueError("bad vmem capacity")
    except Exception:
        cap = 64 << 20  # conservative fallback: v7x has 64 MiB per TensorCore
    return cap - (8 << 20)  # headroom for compiler-internal scratch


def _footprint(rt, dm_pad, tk, in_bytes, out_bytes, w_bufs):
    """VMEM bytes for one grid step (incl. pipelining buffers & intermediates)."""
    return (2 * rt * dm_pad * in_bytes            # x tile (double-buffered)
            + w_bufs * dm_pad * tk * in_bytes     # w1 tile(s)
            + w_bufs * tk * dm_pad * in_bytes     # w2 tile(s)
            + 2 * 8 * tk * 4                      # b1 (sublane-padded)
            + 2 * 8 * dm_pad * 4                  # b2
            + 2 * rt * dm_pad * out_bytes         # out tile
            + rt * dm_pad * 4                     # f32 accumulator / result
            + rt * tk * (4 + in_bytes))           # h (f32) + its bf16 recast


def _plan(d_model, d_ff, row_tile, d_ff_tile, in_bytes, out_bytes):
    budget = _vmem_budget_bytes()
    dm_pad = _round_up(d_model, 128)
    dff_full = _round_up(d_ff, 128)
    rt_max = _round_up(max(16, row_tile), 16)

    # Preferred: weights fully VMEM-resident (double-buffered, then single).
    if _footprint(rt_max, dm_pad, dff_full, in_bytes, out_bytes, 2) <= budget:
        return dict(mode="resident", dm_pad=dm_pad, dff_pad=dff_full,
                    rt_max=rt_max, tk=dff_full, budget=budget,
                    single_buf_w=False)
    if _footprint(rt_max, dm_pad, dff_full, in_bytes, out_bytes, 1) <= budget:
        return dict(mode="resident", dm_pad=dm_pad, dff_pad=dff_full,
                    rt_max=rt_max, tk=dff_full, budget=budget,
                    single_buf_w=True)

    # Fallback: chunk the d_ff reduction.  Keep tk large (fewer acc sweeps).
    tk = None
    for cand in (min(_round_up(d_ff_tile, 128), dff_full), 1024, 512, 256, 128):
        cand = min(cand, dff_full)
        if _footprint(rt_max, dm_pad, cand, in_bytes, out_bytes, 2) <= budget:
            tk = cand
            break
    if tk is None:
        tk = 128
        while rt_max > 64 and _footprint(rt_max, dm_pad, tk, in_bytes,
                                         out_bytes, 2) > budget:
            rt_max = max(64, rt_max // 2)
    elif _footprint(1024, dm_pad, tk, in_bytes, out_bytes, 2) <= budget:
        # rt is the only knob amortizing weight re-streaming in this path.
        rt_max = max(rt_max, 1024)
    return dict(mode="chunked", dm_pad=dm_pad, dff_pad=_round_up(d_ff, tk),
                rt_max=rt_max, tk=tk, budget=budget, single_buf_w=False)


def _prepare_params(w1, b1, w2, b2, dm_pad, dff_pad, mxu_dtype):
    """Pad + cast weights once (hoisted out of the per-call path)."""
    d_model, d_ff = w1.shape
    pm, pf = dm_pad - d_model, dff_pad - d_ff
    w1p = w1 if (pm == 0 and pf == 0) else jnp.pad(w1, ((0, pm), (0, pf)))
    w2p = w2 if (pm == 0 and pf == 0) else jnp.pad(w2, ((0, pf), (0, pm)))
    w1p = w1p.astype(mxu_dtype)
    w2p = w2p.astype(mxu_dtype)
    b1p = (b1 if pf == 0 else jnp.pad(b1, (0, pf))).astype(jnp.float32)
    b2p = (b2 if pm == 0 else jnp.pad(b2, (0, pm))).astype(jnp.float32)
    return w1p, b1p.reshape(1, dff_pad), w2p, b2p.reshape(1, dm_pad)


# ---------------------------------------------------------------------------
# Kernel launcher
# ---------------------------------------------------------------------------

def _apply_ffn(x, w1p, b1p, w2p, b2p, *, d_model, d_ff, plan, mxu_dtype):
    orig_shape = x.shape
    out_dtype = x.dtype
    n = 1
    for d in orig_shape[:-1]:
        n *= d
    in_bytes = jnp.dtype(mxu_dtype).itemsize
    out_bytes = jnp.dtype(out_dtype).itemsize
    dm_pad, dff_pad, tk = plan["dm_pad"], plan["dff_pad"], plan["tk"]
    resident = plan["mode"] == "resident"

    # Row tile: multiple of sublane packing; >=2 tiles when weights are
    # resident so v7x's 2nd TensorCore gets work (harmless on 1-TC chips).
    sub = max(8, 32 // in_bytes)
    rt = _round_up(min(plan["rt_max"], _round_up(n, sub)), sub)
    if resident and n > sub and _round_up(n, rt) // rt < 2:
        rt = _round_up((n + 1) // 2, sub)
    n_pad = _round_up(n, rt)

    x2 = x.reshape(n, d_model)
    if n_pad != n or dm_pad != d_model:
        x2 = jnp.pad(x2, ((0, n_pad - n), (0, dm_pad - d_model)))
    x2 = x2.astype(mxu_dtype)

    w_bufs = 1 if plan["single_buf_w"] else 2
    footprint = _footprint(rt, dm_pad, tk, in_bytes, out_bytes, w_bufs)
    vmem_limit = int(min(max(int(1.25 * footprint) + (2 << 20), 32 << 20),
                         plan["budget"]))

    n_row_tiles = n_pad // rt
    w_passes = 1 if resident else n_row_tiles
    cost = pl.CostEstimate(
        flops=int(4 * n * d_model * d_ff),
        transcendentals=0,
        bytes_accessed=int(n_pad * dm_pad * (in_bytes + out_bytes)
                           + w_passes * (w1p.size + w2p.size) * in_bytes
                           + (b1p.size + b2p.size) * 4),
    )

    def w_spec(shape, index_map):
        # Single-buffer resident weights only when double-buffering them
        # would blow the VMEM budget (e.g. v7x's 64 MiB).
        if plan["single_buf_w"]:
            try:
                return pl.BlockSpec(shape, index_map,
                                    pipeline_mode=pl.Buffered(1))
            except Exception:
                pass
        return pl.BlockSpec(shape, index_map)

    if resident:
        grid_spec = pltpu.PrefetchScalarGridSpec(
            num_scalar_prefetch=0,
            grid=(n_row_tiles,),
            in_specs=[
                pl.BlockSpec((rt, dm_pad), lambda i: (i, 0)),      # x rows
                w_spec((dm_pad, dff_pad), lambda i: (0, 0)),       # w1 (resident)
                pl.BlockSpec((1, dff_pad), lambda i: (0, 0)),      # b1
                w_spec((dff_pad, dm_pad), lambda i: (0, 0)),       # w2 (resident)
                pl.BlockSpec((1, dm_pad), lambda i: (0, 0)),       # b2
            ],
            out_specs=pl.BlockSpec((rt, dm_pad), lambda i: (i, 0)),
        )
        kernel = _ffn_kernel_resident
        dim_sem = ("parallel",)
    else:
        grid_spec = pltpu.PrefetchScalarGridSpec(
            num_scalar_prefetch=0,
            grid=(n_row_tiles, dff_pad // tk),
            in_specs=[
                pl.BlockSpec((rt, dm_pad), lambda i, j: (i, 0)),   # x rows
                pl.BlockSpec((dm_pad, tk), lambda i, j: (0, j)),   # w1 chunk
                pl.BlockSpec((1, tk), lambda i, j: (0, j)),        # b1 chunk
                pl.BlockSpec((tk, dm_pad), lambda i, j: (j, 0)),   # w2 chunk
                pl.BlockSpec((1, dm_pad), lambda i, j: (0, 0)),    # b2
            ],
            out_specs=pl.BlockSpec((rt, dm_pad), lambda i, j: (i, 0)),
            scratch_shapes=[pltpu.VMEM((rt, dm_pad), jnp.float32)],
        )
        kernel = _ffn_kernel_chunked
        dim_sem = ("parallel", "arbitrary")

    out = pl.pallas_call(
        kernel,
        out_shape=jax.ShapeDtypeStruct((n_pad, dm_pad), out_dtype),
        grid_spec=grid_spec,
        compiler_params=pltpu.CompilerParams(
            dimension_semantics=dim_sem,
            vmem_limit_bytes=vmem_limit,
        ),
        cost_estimate=cost,
    )(x2, w1p, b1p, w2p, b2p)

    if n_pad != n or dm_pad != d_model:
        out = out[:n, :d_model]
    return out.reshape(orig_shape)


# ---------------------------------------------------------------------------
# Public API
# ---------------------------------------------------------------------------

def make_positionwise_feed_forward(w1, b1, w2, b2, *, row_tile=512,
                                   d_ff_tile=1024, mxu_dtype=jnp.bfloat16):
    """Prepare (pad+cast) the FFN weights once and return a jitted x -> y fn.

    w1: (d_model, d_ff), b1: (d_ff,), w2: (d_ff, d_model), b2: (d_model,).
    """
    d_model, d_ff = w1.shape
    in_bytes = jnp.dtype(mxu_dtype).itemsize
    plan = _plan(d_model, d_ff, row_tile, d_ff_tile, in_bytes, out_bytes=4)
    params = _prepare_params(w1, b1, w2, b2, plan["dm_pad"], plan["dff_pad"],
                             mxu_dtype)

    @jax.jit
    def apply(x, w1p, b1p, w2p, b2p):
        return _apply_ffn(x, w1p, b1p, w2p, b2p, d_model=d_model, d_ff=d_ff,
                          plan=plan, mxu_dtype=mxu_dtype)

    return lambda x: apply(x, *params)


def positionwise_feed_forward(x, w1, b1, w2, b2, **kwargs):
    """One-shot convenience wrapper.  For repeated calls prefer
    make_positionwise_feed_forward so the weight pad/cast prologue runs once."""
    return make_positionwise_feed_forward(w1, b1, w2, b2, **kwargs)(x)


def init_params(key, d_model, d_ff, dtype=jnp.float32):
    """nn.Linear-shaped params (weights stored transposed as (in, out));
    bounds mimic PyTorch's default uniform(-1/sqrt(fan_in), 1/sqrt(fan_in))."""
    k1, k2, k3, k4 = jax.random.split(key, 4)
    bound1 = 1.0 / (d_model ** 0.5)
    bound2 = 1.0 / (d_ff ** 0.5)
    w1 = jax.random.uniform(k1, (d_model, d_ff), dtype, -bound1, bound1)
    b1 = jax.random.uniform(k2, (d_ff,), dtype, -bound1, bound1)
    w2 = jax.random.uniform(k3, (d_ff, d_model), dtype, -bound2, bound2)
    b2 = jax.random.uniform(k4, (d_model,), dtype, -bound2, bound2)
    return w1, b1, w2, b2


if __name__ == "__main__":
    # small shapes: batch=2, seq=8, d_model=32, d_ff=64
    batch, seq, d_model, d_ff = 2, 8, 32, 64
    key = jax.random.PRNGKey(0)
    kx, kp = jax.random.split(key)
    x = jax.random.normal(kx, (batch, seq, d_model), jnp.float32)
    w1, b1, w2, b2 = init_params(kp, d_model, d_ff)

    ffn = make_positionwise_feed_forward(w1, b1, w2, b2)
    y = jax.block_until_ready(ffn(x))

    # pure-JAX f32 reference (eval-mode FFN); kernel uses bf16 MXU operands
    # with f32 accumulation, so compare with loosened tolerance.
    ref = jnp.maximum(x @ w1 + b1, 0.0) @ w2 + b2
    assert y.shape == (batch, seq, d_model)
    assert jnp.allclose(y, ref, atol=5e-2, rtol=5e-2), "mismatch vs reference"

    # TODO(synk): training-mode dropout (p=0.1) omitted; eval-mode semantics only.
    print("KERNEL_OK")
</pallas_src>

<mosaic_0001>
module attributes {stable_mosaic.version = 11 : i64} {
  func.func @_ffn_kernel_resident(%arg0: i32, %arg1: memref<16x128xbf16, #tpu.memory_space<vmem>>, %arg2: memref<128x128xbf16, #tpu.memory_space<vmem>>, %arg3: memref<1x128xf32, #tpu.memory_space<vmem>>, %arg4: memref<128x128xbf16, #tpu.memory_space<vmem>>, %arg5: memref<1x128xf32, #tpu.memory_space<vmem>>, %arg6: memref<16x128xf32, #tpu.memory_space<vmem>>) attributes {dimension_semantics = [#tpu.dimension_semantics<parallel>], iteration_bounds = array<i64: 1>, scalar_prefetch = 0 : i64, scratch_operands = 0 : i64, tpu.core_type = #tpu.core_type<tc>, window_params = [{transform_indices = @transform_0, window_bounds = array<i64: 16, 128>}, {pipeline_mode = #tpu.pipeline_mode<synchronous>, transform_indices = @transform_1, window_bounds = array<i64: 128, 128>}, {pipeline_mode = #tpu.pipeline_mode<synchronous>, transform_indices = @transform_2, window_bounds = array<i64: 1, 128>}, {pipeline_mode = #tpu.pipeline_mode<synchronous>, transform_indices = @transform_3, window_bounds = array<i64: 128, 128>}, {pipeline_mode = #tpu.pipeline_mode<synchronous>, transform_indices = @transform_4, window_bounds = array<i64: 1, 128>}, {transform_indices = @transform_5, window_bounds = array<i64: 16, 128>}]} {
    %c0 = arith.constant 0 : index
    %c0_0 = arith.constant 0 : index
    %0 = vector.load %arg1[%c0, %c0_0] : memref<16x128xbf16, #tpu.memory_space<vmem>>, vector<16x128xbf16>
    %c0_1 = arith.constant 0 : index
    %c0_2 = arith.constant 0 : index
    %1 = vector.load %arg2[%c0_1, %c0_2] : memref<128x128xbf16, #tpu.memory_space<vmem>>, vector<128x128xbf16>
    %cst = arith.constant dense<0.000000e+00> : vector<16x128xf32>
    %2 = tpu.matmul %0, %1, %cst {dimension_numbers = #tpu.dot_dimension_numbers<[1], [0], [0], [1], [0, 0, 1, 1], [], []>} : vector<16x128xbf16>, vector<128x128xbf16>, vector<16x128xf32> -> vector<16x128xf32>
    %c0_3 = arith.constant 0 : index
    %c0_4 = arith.constant 0 : index
    %3 = vector.load %arg3[%c0_3, %c0_4] : memref<1x128xf32, #tpu.memory_space<vmem>>, vector<1x128xf32>
    %4 = vector.broadcast %3 : vector<1x128xf32> to vector<16x128xf32>
    %5 = arith.addf %2, %4 : vector<16x128xf32>
    %cst_5 = arith.constant 0.000000e+00 : f32
    %6 = vector.broadcast %cst_5 : f32 to vector<16x128xf32>
    %7 = arith.maximumf %5, %6 : vector<16x128xf32>
    %8 = arith.truncf %7 : vector<16x128xf32> to vector<16x128xbf16>
    %c0_6 = arith.constant 0 : index
    %c0_7 = arith.constant 0 : index
    %9 = vector.load %arg4[%c0_6, %c0_7] : memref<128x128xbf16, #tpu.memory_space<vmem>>, vector<128x128xbf16>
    %cst_8 = arith.constant dense<0.000000e+00> : vector<16x128xf32>
    %10 = tpu.matmul %8, %9, %cst_8 {dimension_numbers = #tpu.dot_dimension_numbers<[1], [0], [0], [1], [0, 0, 1, 1], [], []>} : vector<16x128xbf16>, vector<128x128xbf16>, vector<16x128xf32> -> vector<16x128xf32>
    %c0_9 = arith.constant 0 : index
    %c0_10 = arith.constant 0 : index
    %11 = vector.load %arg5[%c0_9, %c0_10] : memref<1x128xf32, #tpu.memory_space<vmem>>, vector<1x128xf32>
    %12 = vector.broadcast %11 : vector<1x128xf32> to vector<16x128xf32>
    %13 = arith.addf %10, %12 : vector<16x128xf32>
    %c0_11 = arith.constant 0 : index
    %c0_12 = arith.constant 0 : index
    %14 = vector.load %arg6[%c0_11, %c0_12] : memref<16x128xf32, #tpu.memory_space<vmem>>, vector<16x128xf32>
    tpu.vector_store %arg6[%c0_11, %c0_12], %13 {strides = array<i32>} : memref<16x128xf32, #tpu.memory_space<vmem>>, vector<16x128xf32>,
    return
  }
  func.func @transform_0(%arg0: i32) -> (i32, i32) {
    %c0_i32 = arith.constant 0 : i32
    %c0_i32_0 = arith.constant 0 : i32
    return %arg0, %c0_i32 : i32, i32
  }
  func.func @transform_1(%arg0: i32) -> (i32, i32) {
    %c0_i32 = arith.constant 0 : i32
    %c0_i32_0 = arith.constant 0 : i32
    %c0_i32_1 = arith.constant 0 : i32
    return %c0_i32, %c0_i32_0 : i32, i32
  }
  func.func @transform_2(%arg0: i32) -> (i32, i32) {
    %c0_i32 = arith.constant 0 : i32
    %c0_i32_0 = arith.constant 0 : i32
    %c0_i32_1 = arith.constant 0 : i32
    return %c0_i32, %c0_i32_0 : i32, i32
  }
  func.func @transform_3(%arg0: i32) -> (i32, i32) {
    %c0_i32 = arith.constant 0 : i32
    %c0_i32_0 = arith.constant 0 : i32
    %c0_i32_1 = arith.constant 0 : i32
    return %c0_i32, %c0_i32_0 : i32, i32
  }
  func.func @transform_4(%arg0: i32) -> (i32, i32) {
    %c0_i32 = arith.constant 0 : i32
    %c0_i32_0 = arith.constant 0 : i32
    %c0_i32_1 = arith.constant 0 : i32
    return %c0_i32, %c0_i32_0 : i32, i32
  }
  func.func @transform_5(%arg0: i32) -> (i32, i32) {
    %c0_i32 = arith.constant 0 : i32
    %c0_i32_0 = arith.constant 0 : i32
    return %arg0, %c0_i32 : i32, i32
  }
}

</mosaic_0001>

<llo_original>
// kernel: apply.1
$region0: #{apply.1}
  #allocation0 [shape = 'u32[]', space=smem, size = 0x4, offset = 0x4, fixed_abs, tag = 'smem constant byte address 0x4 - core index']
  #allocation1 [shape = 'u32[144,128]{1,0:T(1,128)}', space=vmem, size = 0x12000, scoped, tag = 'internal scratch']
  %s0 = inlined_call_operand.vmem [shape: bf16[16,128], index: 0, kind: input, shape index: {}]
  %s1 = inlined_call_operand.hbm [shape: bf16[128,128], index: 1, kind: input, shape index: {}]
  %s2 = inlined_call_operand.vmem [shape: f32[1,128], index: 2, kind: input, shape index: {}]
  %s3 = inlined_call_operand.hbm [shape: bf16[128,128], index: 3, kind: input, shape index: {}]
  %s4 = inlined_call_operand.vmem [shape: f32[1,128], index: 4, kind: input, shape index: {}]
  %s5 = inlined_call_operand.vmem [shape: f32[16,128], index: 5, kind: output, shape index: {}]
  %s6 = sld [smem:[#allocation0]]
  $region38: #{apply.1} parent=0
    _
  %s8 = ssub.s32 1, %s6
  %s9 = scalar_select 0, %s8, %s6
  $region1: #{apply.1} parent=0
    #allocation2 [shape = 'u8[32768]{0}', space=vmem, size = 0x8000, scoped, tag = 'input window, operand 1, single buffered']
    #allocation3 [shape = 's32[1]{0}', space=sflag, size = 0x4, scoped, tag = 'scoped memory for apply.1']
    #allocation4 [shape = 'u8[32768]{0}', space=vmem, size = 0x8000, scoped, tag = 'input window, operand 3, single buffered']
    #allocation5 [shape = 's32[1]{0}', space=sflag, size = 0x4, scoped, tag = 'scoped memory for apply.1']
    %10 = vsyncpa [#allocation3], 0
    %11 = vsyncpa [#allocation5], 0
    // Predicated region
    $region2: #{apply.1} parent=1 // pred_check
      _
    $region3: #{apply.1} parent=1 // pred_check_branch
      %13 = sbr.rel (0) target = $region5
    $region4: #{apply.1} parent=1 // pred_region
      _
    $region5: #{apply.1} parent=1 // pred_fallthru
      _
    // Predicated region
    $region6: #{apply.1} parent=1 // pred_check
      _
    $region7: #{apply.1} parent=1 // pred_check_branch
      %15 = sbr.rel (0) target = $region9
    $region8: #{apply.1} parent=1 // pred_region
      %s17 = ssub.s32 1024, 1024
      %18 = vsyncadd [#allocation3], %s17
      %s19 = sshll.u32 [#allocation2], 4
      %s20 = int_to_ptr.vmem [resolvable:$true] %s19
      %25 = dma.hbm_to_vmem [thread:$0]  %s1, 1024, %s20, [#allocation3], 64, 64, 4
    $region9: #{apply.1} parent=1 // pred_fallthru
      _
    // Predicated region
    $region10: #{apply.1} parent=1 // pred_check
      _
    $region11: #{apply.1} parent=1 // pred_check_branch
      %27 = sbr.rel (0) target = $region13
    $region12: #{apply.1} parent=1 // pred_region
      _
    $region13: #{apply.1} parent=1 // pred_fallthru
      _
    // Predicated region
    $region14: #{apply.1} parent=1 // pred_check
      _
    $region15: #{apply.1} parent=1 // pred_check_branch
      %29 = sbr.rel (0) target = $region17
    $region16: #{apply.1} parent=1 // pred_region
      %s31 = ssub.s32 1024, 1024
      %32 = vsyncadd [#allocation5], %s31
      %s33 = sshll.u32 [#allocation4], 4
      %s34 = int_to_ptr.vmem [resolvable:$true] %s33
      %39 = dma.hbm_to_vmem [thread:$0]  %s3, 1024, %s34, [#allocation5], 64, 64, 4
    $region17: #{apply.1} parent=1 // pred_fallthru
      _
    // Predicated region
    $region18: #{apply.1} parent=1 // pred_check
      _
    $region19: #{apply.1} parent=1 // pred_check_branch
      %41 = sbr.rel (0) target = $region21
    $region20: #{apply.1} parent=1 // pred_region
      _
    $region21: #{apply.1} parent=1 // pred_fallthru
      _
    // Predicated region
    $region22: #{apply.1} parent=1 // pred_check
      _
    $region23: #{apply.1} parent=1 // pred_check_branch
      %43 = sbr.rel (0) target = $region25
    $region24: #{apply.1} parent=1 // pred_region
      %44 = dma.done [#allocation3], 1024
    $region25: #{apply.1} parent=1 // pred_fallthru
      _
    // Predicated region
    $region26: #{apply.1} parent=1 // pred_check
      _
    $region27: #{apply.1} parent=1 // pred_check_branch
      %46 = sbr.rel (0) target = $region29
    $region28: #{apply.1} parent=1 // pred_region
      %47 = dma.done [#allocation5], 1024
    $region29: #{apply.1} parent=1 // pred_fallthru
      _
    %v49 = vld [vmem:[%s0] sm:$0xf]
    %v50 = vld [vmem:[%s0 + $0x4] sm:$0xf]
    %v51 = vld [vmem:[#allocation2] sm:$0xf]
    %v52 = vld [vmem:[#allocation2 + $0x4] sm:$0xf]
    %v53 = vld [vmem:[#allocation2 + $0x8] sm:$0xf]
    %v54 = vld [vmem:[#allocation2 + $0xc] sm:$0xf]
    %v55 = vld [vmem:[#allocation2 + $0x10] sm:$0xf]
    %v56 = vld [vmem:[#allocation2 + $0x14] sm:$0xf]
    %v57 = vld [vmem:[#allocation2 + $0x18] sm:$0xf]
    %v58 = vld [vmem:[#allocation2 + $0x1c] sm:$0xf]
    %v59 = vld [vmem:[#allocation2 + $0x20] sm:$0xf]
    %v60 = vld [vmem:[#allocation2 + $0x24] sm:$0xf]
    %v61 = vld [vmem:[#allocation2 + $0x28] sm:$0xf]
    %v62 = vld [vmem:[#allocation2 + $0x2c] sm:$0xf]
    %v63 = vld [vmem:[#allocation2 + $0x30] sm:$0xf]
    %v64 = vld [vmem:[#allocation2 + $0x34] sm:$0xf]
    %v65 = vld [vmem:[#allocation2 + $0x38] sm:$0xf]
    %v66 = vld [vmem:[#allocation2 + $0x3c] sm:$0xf]
    %v67 = vld [vmem:[%s2] sm:$0x1]
    %v69 = vlaneseq
    %v70 = vshrl.u32 %v69, 7
    %v71 = vsub.s32 0, %v70
    %v72 = vrot.slane %v67, %v71
    %v76 = vunpack.c.l.b16 %v49
    %v77 = vunpack.c.l.b16 %v50
    %v78 = vpack.c.b16 %v77, %v76
    %v96 = vunpack.c.l.b16 %v51
    %v97 = vunpack.c.l.b16 %v52
    %v98 = vunpack.c.l.b16 %v53
    %v99 = vunpack.c.l.b16 %v54
    %v100 = vunpack.c.l.b16 %v55
    %v101 = vunpack.c.l.b16 %v56
    %v102 = vunpack.c.l.b16 %v57
    %v103 = vunpack.c.l.b16 %v58
    %v104 = vunpack.c.l.b16 %v59
    %v105 = vunpack.c.l.b16 %v60
    %v106 = vunpack.c.l.b16 %v61
    %v107 = vunpack.c.l.b16 %v62
    %v108 = vunpack.c.l.b16 %v63
    %v109 = vunpack.c.l.b16 %v64
    %v110 = vunpack.c.l.b16 %v65
    %v111 = vunpack.c.l.b16 %v66
    %v112 = vpack.c.b16 %v97, %v96
    %v113 = vpack.c.b16 %v99, %v98
    %v114 = vpack.c.b16 %v101, %v100
    %v115 = vpack.c.b16 %v103, %v102
    %v116 = vpack.c.b16 %v105, %v104
    %v117 = vpack.c.b16 %v107, %v106
    %v118 = vpack.c.b16 %v109, %v108
    %v119 = vpack.c.b16 %v111, %v110
    %128 = vmatprep.subr.bf16.mxu0 0
    %129 = vmatpush1.bf16.msra.mxu0 %v112
    %130 = vmatprep.subr.bf16.mxu0 0
    %131 = vmatpush1.bf16.msra.mxu0 %v113
    %132 = vmatprep.subr.bf16.mxu0 0
    %133 = vmatpush1.bf16.msra.mxu0 %v114
    %134 = vmatprep.subr.bf16.mxu0 0
    %135 = vmatpush1.bf16.msra.mxu0 %v115
    %136 = vmatprep.subr.bf16.mxu0 0
    %137 = vmatpush1.bf16.msra.mxu0 %v116
    %138 = vmatprep.subr.bf16.mxu0 0
    %139 = vmatpush1.bf16.msra.mxu0 %v117
    %140 = vmatprep.subr.bf16.mxu0 0
    %141 = vmatpush1.bf16.msra.mxu0 %v118
    %142 = vmatprep.subr.bf16.mxu0 0
    %143 = vmatpush1.bf16.msra.mxu0 %v119
    %144 = vmatprep.subr.bf16.mxu0 0
    %145 = vmatpush1.bf16.msra.mxu0 0
    %146 = vmatprep.subr.bf16.mxu0 0
    %147 = vmatpush1.bf16.msra.mxu0 0
    %148 = vmatprep.subr.bf16.mxu0 0
    %149 = vmatpush1.bf16.msra.mxu0 0
    %150 = vmatprep.subr.bf16.mxu0 0
    %151 = vmatpush1.bf16.msra.mxu0 0
    %152 = vmatprep.subr.bf16.mxu0 0
    %153 = vmatpush1.bf16.msra.mxu0 0
    %154 = vmatprep.subr.bf16.mxu0 0
    %155 = vmatpush1.bf16.msra.mxu0 0
    %156 = vmatprep.subr.bf16.mxu0 0
    %157 = vmatpush1.bf16.msra.mxu0 0
    %158 = vmatprep.subr.bf16.mxu0 0
    %159 = vmatpush1.bf16.msra.mxu0 0
    %160 = vmatprep.mubr.bf16.mxu0 0
    %161 = vmatmul.mubr.bf16.gmra.mrb[0].mxu0 %v78
    %v162 = vpop.f32.mrb[0].mxu0
    %v163 = vadd.f32 %v72, %v162
    %v164 = vpop.f32.mrb[0].mxu0
    %v165 = vpop.f32.mrb[0].mxu0
    %v166 = vadd.f32 %v72, %v165
    %v167 = vpop.f32.mrb[0].mxu0
    %168 = vdwg.mxu0
    %v169 = vmax.f32 %v163, 0.0
    %v170 = vmax.f32 %v166, 0.0
    %v171 = vpack.c.bf16 %v170, %v169
    %v172 = vld [vmem:[#allocation4] sm:$0xf]
    %v173 = vld [vmem:[#allocation4 + $0x4] sm:$0xf]
    %v174 = vld [vmem:[#allocation4 + $0x8] sm:$0xf]
    %v175 = vld [vmem:[#allocation4 + $0xc] sm:$0xf]
    %v176 = vld [vmem:[#allocation4 + $0x10] sm:$0xf]
    %v177 = vld [vmem:[#allocation4 + $0x14] sm:$0xf]
    %v178 = vld [vmem:[#allocation4 + $0x18] sm:$0xf]
    %v179 = vld [vmem:[#allocation4 + $0x1c] sm:$0xf]
    %v180 = vld [vmem:[#allocation4 + $0x20] sm:$0xf]
    %v181 = vld [vmem:[#allocation4 + $0x24] sm:$0xf]
    %v182 = vld [vmem:[#allocation4 + $0x28] sm:$0xf]
    %v183 = vld [vmem:[#allocation4 + $0x2c] sm:$0xf]
    %v184 = vld [vmem:[#allocation4 + $0x30] sm:$0xf]
    %v185 = vld [vmem:[#allocation4 + $0x34] sm:$0xf]
    %v186 = vld [vmem:[#allocation4 + $0x38] sm:$0xf]
    %v187 = vld [vmem:[#allocation4 + $0x3c] sm:$0xf]
    %v188 = vld [vmem:[%s4] sm:$0x1]
    %v190 = vlaneseq
    %v191 = vshrl.u32 %v190, 7
    %v192 = vsub.s32 0, %v191
    %v193 = vrot.slane %v188, %v192
    %v211 = vunpack.c.l.b16 %v172
    %v212 = vunpack.c.l.b16 %v173
    %v213 = vunpack.c.l.b16 %v174
    %v214 = vunpack.c.l.b16 %v175
    %v215 = vunpack.c.l.b16 %v176
    %v216 = vunpack.c.l.b16 %v177
    %v217 = vunpack.c.l.b16 %v178
    %v218 = vunpack.c.l.b16 %v179
    %v219 = vunpack.c.l.b16 %v180
    %v220 = vunpack.c.l.b16 %v181
    %v221 = vunpack.c.l.b16 %v182
    %v222 = vunpack.c.l.b16 %v183
    %v223 = vunpack.c.l.b16 %v184
    %v224 = vunpack.c.l.b16 %v185
    %v225 = vunpack.c.l.b16 %v186
    %v226 = vunpack.c.l.b16 %v187
    %v227 = vpack.c.b16 %v212, %v211
    %v228 = vpack.c.b16 %v214, %v213
    %v229 = vpack.c.b16 %v216, %v215
    %v230 = vpack.c.b16 %v218, %v217
    %v231 = vpack.c.b16 %v220, %v219
    %v232 = vpack.c.b16 %v222, %v221
    %v233 = vpack.c.b16 %v224, %v223
    %v234 = vpack.c.b16 %v226, %v225
    %243 = vmatprep.subr.bf16.mxu0 0
    %244 = vmatpush1.bf16.msra.mxu0 %v227
    %245 = vmatprep.subr.bf16.mxu0 0
    %246 = vmatpush1.bf16.msra.mxu0 %v228
    %247 = vmatprep.subr.bf16.mxu0 0
    %248 = vmatpush1.bf16.msra.mxu0 %v229
    %249 = vmatprep.subr.bf16.mxu0 0
    %250 = vmatpush1.bf16.msra.mxu0 %v230
    %251 = vmatprep.subr.bf16.mxu0 0
    %252 = vmatpush1.bf16.msra.mxu0 %v231
    %253 = vmatprep.subr.bf16.mxu0 0
    %254 = vmatpush1.bf16.msra.mxu0 %v232
    %255 = vmatprep.subr.bf16.mxu0 0
    %256 = vmatpush1.bf16.msra.mxu0 %v233
    %257 = vmatprep.subr.bf16.mxu0 0
    %258 = vmatpush1.bf16.msra.mxu0 %v234
    %259 = vmatprep.subr.bf16.mxu0 0
    %260 = vmatpush1.bf16.msra.mxu0 0
    %261 = vmatprep.subr.bf16.mxu0 0
    %262 = vmatpush1.bf16.msra.mxu0 0
    %263 = vmatprep.subr.bf16.mxu0 0
    %264 = vmatpush1.bf16.msra.mxu0 0
    %265 = vmatprep.subr.bf16.mxu0 0
    %266 = vmatpush1.bf16.msra.mxu0 0
    %267 = vmatprep.subr.bf16.mxu0 0
    %268 = vmatpush1.bf16.msra.mxu0 0
    %269 = vmatprep.subr.bf16.mxu0 0
    %270 = vmatpush1.bf16.msra.mxu0 0
    %271 = vmatprep.subr.bf16.mxu0 0
    %272 = vmatpush1.bf16.msra.mxu0 0
    %273 = vmatprep.subr.bf16.mxu0 0
    %274 = vmatpush1.bf16.msra.mxu0 0
    %275 = vmatprep.mubr.bf16.mxu0 0
    %276 = vmatmul.mubr.bf16.gmra.mrb[0].mxu0 %v171
    %v277 = vpop.f32.mrb[0].mxu0
    %v278 = vadd.f32 %v193, %v277
    %v279 = vpop.f32.mrb[0].mxu0
    %v280 = vpop.f32.mrb[0].mxu0
    %v281 = vadd.f32 %v193, %v280
    %v282 = vpop.f32.mrb[0].mxu0
    %283 = vdwg.mxu0
    %284 = vst [vmem:[%s5] sm:$0xff] %v278
    %285 = vst [vmem:[%s5 + $0x8] sm:$0xff] %v281
    // Predicated region
    $region30: #{apply.1} parent=1 // pred_check
      _
    $region31: #{apply.1} parent=1 // pred_check_branch
      %287 = sbr.rel (0) target = $region33
    $region32: #{apply.1} parent=1 // pred_region
      _
    $region33: #{apply.1} parent=1 // pred_fallthru
      _
    // Predicated region
    $region34: #{apply.1} parent=1 // pred_check
      _
    $region35: #{apply.1} parent=1 // pred_check_branch
      %289 = sbr.rel (0) target = $region37
    $region36: #{apply.1} parent=1 // pred_region
      _
    $region37: #{apply.1} parent=1 // pred_fallthru
      _
    %290 = vsyncpa [#allocation3], 1
    %291 = vsyncpa [#allocation5], 1

</llo_original>
